<compile_context>
chip_gen: v5e
topology: v5e:2x2
jax: 0.10.0
libtpu: 0.0.40
codegen_flags: <defaults>
</compile_context>

<pallas_src>
import jax
import jax.numpy as jnp
from jax import lax
from jax.experimental import pallas as pl
from jax.experimental.pallas import tpu as pltpu


def _round_up(x, m):
    return (x + m - 1) // m * m


def _embed_kernel(labels_ref, table_ref, out_ref):
    # labels_ref : VMEM (TB, 1)              int32
    # table_ref  : VMEM (num_labels, D_pad)  compute dtype (VMEM-resident)
    # out_ref    : VMEM (TB, D_pad)          compute dtype
    tb = out_ref.shape[0]
    num_labels = table_ref.shape[0]

    class_ids = lax.broadcasted_iota(jnp.int32, (tb, num_labels), 1)
    one_hot = (labels_ref[...] == class_ids).astype(table_ref.dtype)
    out_ref[...] = jnp.dot(
        one_hot, table_ref[...], preferred_element_type=jnp.float32
    ).astype(out_ref.dtype)


def _vmem_capacity_bytes():
    try:
        return int(pltpu.get_tpu_info().vmem_capacity_bytes)
    except Exception:
        return 64 << 20  # conservative: v7x per-TensorCore VMEM


def label_embedder(labels, table, *, max_tile_rows=2048):
    """Equivalent of LabelEmbedder.forward: table[labels]."""
    orig_shape = labels.shape
    orig_dtype = table.dtype
    flat = labels.reshape(-1).astype(jnp.int32)
    B = int(flat.shape[0])
    num_labels, D = int(table.shape[0]), int(table.shape[1])

    # Integer tables: no int MXU on v7x -> compute in f32, cast back.
    if jnp.issubdtype(orig_dtype, jnp.floating):
        compute_dtype = orig_dtype
    else:
        compute_dtype = jnp.float32
    dtype_bytes = jnp.dtype(compute_dtype).itemsize

    # ---- lane-dense output: pad the embedding width to a multiple of 128 ----
    d_pad = _round_up(D, 128)
    table_p = table.astype(compute_dtype)
    if d_pad != D:
        table_p = jnp.pad(table_p, ((0, 0), (0, d_pad - D)))

    # ---- VMEM budget (per-generation, with headroom) ----
    vmem_cap = _vmem_capacity_bytes()
    budget = int(vmem_cap * 0.75)

    row_align = max(8, 32 // max(dtype_bytes, 1))        # 8 f32 / 16 bf16 / 32 int8
    table_vmem = _round_up(num_labels, row_align) * d_pad * dtype_bytes  # 1 buffer
    per_row = (
        2 * d_pad * dtype_bytes          # double-buffered output tile
        + 2 * 128 * 4                    # double-buffered (tb,1) int32 labels, lane-padded
        + _round_up(num_labels, 128) * 4  # one-hot temporary
        + d_pad * 4                      # f32 matmul result before cast
    )
    avail = max(budget - table_vmem - (2 << 20), per_row * row_align)
    tb = int(min(max_tile_rows, max(row_align, (avail // per_row))))
    tb = max(row_align, tb // row_align * row_align)

    # Give both v7x TensorCores work: at least 2 grid steps when B permits.
    if B <= row_align:
        tb = row_align
    else:
        tb = min(tb, max(row_align, _round_up(-(-B // 2), row_align)))

    # Pad B to a whole number of tiles -> every store is full-width / unmasked.
    b_pad = _round_up(max(B, 1), tb)
    if b_pad != B:
        flat = jnp.pad(flat, (0, b_pad - B))  # pad with label 0 (sliced off below)
    flat2d = flat.reshape(b_pad, 1)

    # Limit budgets a possible second table buffer (fallback path) + headroom,
    # but never sits at physical capacity.
    vmem_limit = 2 * table_vmem + tb * per_row + (4 << 20)
    vmem_limit = int(min(max(vmem_limit, 16 << 20), int(vmem_cap * 0.85)))

    table_bytes_hbm = num_labels * d_pad * dtype_bytes
    cost = pl.CostEstimate(
        flops=2 * b_pad * num_labels * d_pad,
        transcendentals=0,
        bytes_accessed=b_pad * d_pad * dtype_bytes + table_bytes_hbm + b_pad * 4,
    )

    def build(single_buffer_table):
        if single_buffer_table:
            table_spec = pl.BlockSpec(
                (num_labels, d_pad), lambda i: (0, 0),
                pipeline_mode=pl.Buffered(1),
            )
        else:
            table_spec = pl.BlockSpec((num_labels, d_pad), lambda i: (0, 0))
        return pl.pallas_call(
            _embed_kernel,
            out_shape=jax.ShapeDtypeStruct((b_pad, d_pad), compute_dtype),
            grid_spec=pltpu.PrefetchScalarGridSpec(
                num_scalar_prefetch=0,
                grid=(b_pad // tb,),
                in_specs=[
                    pl.BlockSpec((tb, 1), lambda i: (i, 0)),   # labels tile
                    table_spec,                                # resident table
                ],
                out_specs=pl.BlockSpec((tb, d_pad), lambda i: (i, 0)),
            ),
            compiler_params=pltpu.CompilerParams(
                dimension_semantics=("parallel",),
                vmem_limit_bytes=vmem_limit,
            ),
            cost_estimate=cost,
        )

    try:
        out = build(True)(flat2d, table_p)
    except Exception:
        # Fallback for jax versions that reject buffer_count=1 on an
        # invariant BlockSpec: plain double-buffered table.
        out = build(False)(flat2d, table_p)

    out = out[:B, :D]
    if out.dtype != orig_dtype:
        # TODO(synk): exact only while integer table entries fit in f32 mantissa.
        out = out.astype(orig_dtype)
    return out.reshape(*orig_shape, D)


if __name__ == "__main__":
    num_labels = 16
    embedding_dim = 128   # lane-aligned embedding width

    key = jax.random.PRNGKey(0)
    k_table, k_labels = jax.random.split(key)

    # Deterministic "weights": nn.Embedding default init is N(0, 1).
    table = jax.random.normal(k_table, (num_labels, embedding_dim), dtype=jnp.float32)

    # Small batch of class ids, shape (2, 8) like (batch, seq).
    labels = jax.random.randint(k_labels, (2, 8), 0, num_labels, dtype=jnp.int32)

    out = label_embedder(labels, table)
    out = jax.block_until_ready(out)

    # Pure-JAX reference.
    ref = jnp.take(table, labels, axis=0)
    assert out.shape == (2, 8, embedding_dim), out.shape
    assert out.dtype == table.dtype, out.dtype
    assert jnp.allclose(out, ref), "mismatch vs reference gather"

    print("KERNEL_OK")
</pallas_src>

<mosaic_0001>
module attributes {stable_mosaic.version = 11 : i64} {
  func.func @_embed_kernel(%arg0: i32, %arg1: memref<8x1xi32, #tpu.memory_space<vmem>>, %arg2: memref<16x128xf32, #tpu.memory_space<vmem>>, %arg3: memref<8x128xf32, #tpu.memory_space<vmem>>) attributes {dimension_semantics = [#tpu.dimension_semantics<parallel>], iteration_bounds = array<i64: 2>, scalar_prefetch = 0 : i64, scratch_operands = 0 : i64, tpu.core_type = #tpu.core_type<tc>, window_params = [{transform_indices = @transform_0, window_bounds = array<i64: 8, 1>}, {pipeline_mode = #tpu.pipeline_mode<synchronous>, transform_indices = @transform_1, window_bounds = array<i64: 16, 128>}, {transform_indices = @transform_2, window_bounds = array<i64: 8, 128>}]} {
    %0 = tpu.iota {dimensions = array<i32: 1>} : vector<8x16xi32>
    %c0 = arith.constant 0 : index
    %c0_0 = arith.constant 0 : index
    %1 = vector.load %arg1[%c0, %c0_0] : memref<8x1xi32, #tpu.memory_space<vmem>>, vector<8x1xi32>
    %2 = vector.broadcast %1 : vector<8x1xi32> to vector<8x16xi32>
    %3 = arith.cmpi eq, %2, %0 : vector<8x16xi32>
    %4 = arith.extui %3 : vector<8x16xi1> to vector<8x16xi32>
    %5 = arith.sitofp %4 : vector<8x16xi32> to vector<8x16xf32>
    %c0_1 = arith.constant 0 : index
    %c0_2 = arith.constant 0 : index
    %6 = vector.load %arg2[%c0_1, %c0_2] : memref<16x128xf32, #tpu.memory_space<vmem>>, vector<16x128xf32>
    %cst = arith.constant dense<0.000000e+00> : vector<8x128xf32>
    %7 = tpu.matmul %5, %6, %cst {dimension_numbers = #tpu.dot_dimension_numbers<[1], [0], [0], [1], [0, 0, 1, 1], [], []>} : vector<8x16xf32>, vector<16x128xf32>, vector<8x128xf32> -> vector<8x128xf32>
    %c0_3 = arith.constant 0 : index
    %c0_4 = arith.constant 0 : index
    %8 = vector.load %arg3[%c0_3, %c0_4] : memref<8x128xf32, #tpu.memory_space<vmem>>, vector<8x128xf32>
    tpu.vector_store %arg3[%c0_3, %c0_4], %7 {strides = array<i32>} : memref<8x128xf32, #tpu.memory_space<vmem>>, vector<8x128xf32>,
    return
  }
  func.func @transform_0(%arg0: i32) -> (i32, i32) {
    %c0_i32 = arith.constant 0 : i32
    %c0_i32_0 = arith.constant 0 : i32
    return %arg0, %c0_i32 : i32, i32
  }
  func.func @transform_1(%arg0: i32) -> (i32, i32) {
    %c0_i32 = arith.constant 0 : i32
    %c0_i32_0 = arith.constant 0 : i32
    %c0_i32_1 = arith.constant 0 : i32
    return %c0_i32, %c0_i32_0 : i32, i32
  }
  func.func @transform_2(%arg0: i32) -> (i32, i32) {
    %c0_i32 = arith.constant 0 : i32
    %c0_i32_0 = arith.constant 0 : i32
    return %arg0, %c0_i32 : i32, i32
  }
}

module attributes {stable_mosaic.version = 11 : i64} {
  func.func @_embed_kernel(%arg0: i32, %arg1: memref<8x1xi32, #tpu.memory_space<vmem>>, %arg2: memref<16x128xf32, #tpu.memory_space<vmem>>, %arg3: memref<8x128xf32, #tpu.memory_space<vmem>>) attributes {dimension_semantics = [#tpu.dimension_semantics<parallel>], iteration_bounds = array<i64: 2>, scalar_prefetch = 0 : i64, scratch_operands = 0 : i64, tpu.core_type = #tpu.core_type<tc>, window_params = [{transform_indices = @transform_0, window_bounds = array<i64: 8, 1>}, {pipeline_mode = #tpu.pipeline_mode<synchronous>, transform_indices = @transform_1, window_bounds = array<i64: 16, 128>}, {transform_indices = @transform_2, window_bounds = array<i64: 8, 128>}]} {
    %0 = tpu.iota {dimensions = array<i32: 1>} : vector<8x16xi32>
    %c0 = arith.constant 0 : index
    %c0_0 = arith.constant 0 : index
    %1 = vector.load %arg1[%c0, %c0_0] : memref<8x1xi32, #tpu.memory_space<vmem>>, vector<8x1xi32>
    %2 = vector.broadcast %1 : vector<8x1xi32> to vector<8x16xi32>
    %3 = arith.cmpi eq, %2, %0 : vector<8x16xi32>
    %4 = arith.extui %3 : vector<8x16xi1> to vector<8x16xi32>
    %5 = arith.sitofp %4 : vector<8x16xi32> to vector<8x16xf32>
    %c0_1 = arith.constant 0 : index
    %c0_2 = arith.constant 0 : index
    %6 = vector.load %arg2[%c0_1, %c0_2] : memref<16x128xf32, #tpu.memory_space<vmem>>, vector<16x128xf32>
    %cst = arith.constant dense<0.000000e+00> : vector<8x128xf32>
    %7 = tpu.matmul %5, %6, %cst {dimension_numbers = #tpu.dot_dimension_numbers<[1], [0], [0], [1], [0, 0, 1, 1], [], []>} : vector<8x16xf32>, vector<16x128xf32>, vector<8x128xf32> -> vector<8x128xf32>
    %c0_3 = arith.constant 0 : index
    %c0_4 = arith.constant 0 : index
    %8 = vector.load %arg3[%c0_3, %c0_4] : memref<8x128xf32, #tpu.memory_space<vmem>>, vector<8x128xf32>
    tpu.vector_store %arg3[%c0_3, %c0_4], %7 {strides = array<i32>} : memref<8x128xf32, #tpu.memory_space<vmem>>, vector<8x128xf32>,
    return
  }
  func.func @transform_0(%arg0: i32) -> (i32, i32) {
    %c0_i32 = arith.constant 0 : i32
    %c0_i32_0 = arith.constant 0 : i32
    return %arg0, %c0_i32 : i32, i32
  }
  func.func @transform_1(%arg0: i32) -> (i32, i32) {
    %c0_i32 = arith.constant 0 : i32
    %c0_i32_0 = arith.constant 0 : i32
    %c0_i32_1 = arith.constant 0 : i32
    return %c0_i32, %c0_i32_0 : i32, i32
  }
  func.func @transform_2(%arg0: i32) -> (i32, i32) {
    %c0_i32 = arith.constant 0 : i32
    %c0_i32_0 = arith.constant 0 : i32
    return %arg0, %c0_i32 : i32, i32
  }
}

</mosaic_0001>

<llo_original>
// kernel: tpu_custom_call.1
$region0: #{tpu_custom_call.1}
  #allocation0 [shape = 'u32[]', space=smem, size = 0x4, offset = 0x4, fixed_abs, tag = 'smem constant byte address 0x4 - core index']
  #allocation1 [shape = 'u32[72,128]{1,0:T(1,128)}', space=vmem, size = 0x9000, scoped, tag = 'internal scratch']
  %s0 = inlined_call_operand.vmem [shape: s32[16,1], index: 0, kind: input, shape index: {}]
  %s1 = inlined_call_operand.vmem [shape: f32[16,128], index: 1, kind: input, shape index: {}]
  %s2 = inlined_call_operand.hbm [shape: f32[16,128], index: 2, kind: output, shape index: {}]
  %s3 = sld [smem:[#allocation0]]
  $region41: #{tpu_custom_call.1} parent=0
    _
  %s5 = ssub.s32 1, %s3
  %s6 = scalar_select 0, %s5, %s3
  $region1: #{tpu_custom_call.1} parent=0
    #allocation2 [shape = 'u8[8192]{0}', space=vmem, size = 0x2000, scoped, tag = 'output window, operand 0']
    #allocation3 [shape = 's32[2]{0}', space=sflag, size = 0x8, scoped, tag = 'scoped memory for tpu_custom_call.1']
    %7 = vsyncpa [#allocation3], 0
    %s8 = scalar_lea.sflag [#allocation3], 1
    %9 = vsyncpa %s8, 0
    loop: start=0, step=1, limit=4
    $region2: #{tpu_custom_call.1} parent=1 // loop_pre_header
      _
    $region3: #{tpu_custom_call.1} parent=1 // loop_header
      %s11 = sphi 0, %s15
      %p12 = scmp.ge.s32.totalorder %s11, 4
      %s21 = sphi 0, %s23
      %s24 = sphi 0, %s21
      %s25 = sphi 0, %s24
      %s41 = sphi 0, %s25
      %s45 = sphi 0, %s45
      %s47 = sphi 0, %s45
      %s48 = sphi 0, %s47
      %s62 = sphi 0, %s48
      %s68 = sphi 0, %s70
      %s71 = sphi 0, %s68
      %s72 = sphi 0, %s71
      %s88 = sphi 0, %s72
    $region4: #{tpu_custom_call.1} parent=1 // loop_header_branch
      %14 = sbr.rel (%p12) target = $region8
    $region5: #{tpu_custom_call.1} parent=1 // loop_body
      %s16 = ssub.s32 %s11, 1
      %s17 = ssub.s32 %s11, 2
      %s18 = sadd.s32 %s11, 1
      %s19 = ssub.s32 %s11, %s18
      %p20 = scmp.eq.s32.totalorder %s19, 0
      %s22 = sadd.s32 %s21, 1
      %s23 = scalar_select %p20, %s21, %s22
      %p26 = pneg %p20
      %p27 = scmp.eq.s32.totalorder %s11, 1
      %p28 = por %p26, %p27
      %p29 = scmp.ne.s32.totalorder %s21, %s24
      %p30 = scmp.eq.s32.totalorder %s11, 0
      %p31 = por %p29, %p30
      %p32 = scmp.ne.s32.totalorder %s21, %s24
      %p33 = scmp.eq.s32.totalorder %s16, 1
      %p34 = por %p32, %p33
      %p35 = scmp.ne.s32.totalorder %s24, %s25
      %p36 = scmp.eq.s32.totalorder %s16, 0
      %p37 = por %p35, %p36
      %p38 = scmp.ne.s32.totalorder %s24, %s25
      %p39 = scmp.eq.s32.totalorder %s17, 1
      %p40 = por %p38, %p39
      %p42 = scmp.ne.s32.totalorder %s25, %s41
      %p43 = scmp.eq.s32.totalorder %s17, 0
      %p44 = por %p42, %p43
      %s46 = sadd.s32 %s45, 1
      %p49 = scmp.eq.s32.totalorder %s11, 1
      %p50 = scmp.ne.s32.totalorder %s45, %s47
      %p51 = scmp.eq.s32.totalorder %s11, 0
      %p52 = por %p50, %p51
      %p53 = scmp.ne.s32.totalorder %s45, %s47
      %p54 = scmp.eq.s32.totalorder %s16, 1
      %p55 = por %p53, %p54
      %p56 = scmp.ne.s32.totalorder %s47, %s48
      %p57 = scmp.eq.s32.totalorder %s16, 0
      %p58 = por %p56, %p57
      %p59 = scmp.ne.s32.totalorder %s47, %s48
      %p60 = scmp.eq.s32.totalorder %s17, 1
      %p61 = por %p59, %p60
      %p63 = scmp.ne.s32.totalorder %s48, %s62
      %p64 = scmp.eq.s32.totalorder %s17, 0
      %p65 = por %p63, %p64
      %s66 = ssub.s32 %s11, %s18
      %p67 = scmp.eq.s32.totalorder %s66, 0
      %s69 = sadd.s32 %s68, 1
      %s70 = scalar_select %p67, %s68, %s69
      %p73 = pneg %p67
      %p74 = scmp.eq.s32.totalorder %s11, 1
      %p75 = por %p73, %p74
      %p76 = scmp.ne.s32.totalorder %s68, %s71
      %p77 = scmp.eq.s32.totalorder %s11, 0
      %p78 = por %p76, %p77
      %p79 = scmp.ne.s32.totalorder %s68, %s71
      %p80 = scmp.eq.s32.totalorder %s16, 1
      %p81 = por %p79, %p80
      %p82 = scmp.ne.s32.totalorder %s71, %s72
      %p83 = scmp.eq.s32.totalorder %s16, 0
      %p84 = por %p82, %p83
      %p85 = scmp.ne.s32.totalorder %s71, %s72
      %p86 = scmp.eq.s32.totalorder %s17, 1
      %p87 = por %p85, %p86
      %p89 = scmp.ne.s32.totalorder %s72, %s88
      %p90 = scmp.eq.s32.totalorder %s17, 0
      %p91 = por %p89, %p90
      %p92 = scmp.le.s32.totalorder 1, %s11
      %p93 = scmp.lt.s32.totalorder %s11, 3
      %p94 = pnand %p92, %p93
      %p95 = pneg %p94
      // Predicated region
      $region9: #{tpu_custom_call.1} parent=5 // pred_check
        _
      $region10: #{tpu_custom_call.1} parent=5 // pred_check_branch
        %97 = sbr.rel (%p94) target = $region12
      $region11: #{tpu_custom_call.1} parent=5 // pred_region
        %s98 = ssub.s32 %s11, 1
        // Predicated region
        $region13: #{tpu_custom_call.1} parent=11 // pred_check
          %p99 = pneg %p58
        $region14: #{tpu_custom_call.1} parent=11 // pred_check_branch
          %101 = sbr.rel (%p99) target = $region16
        $region15: #{tpu_custom_call.1} parent=11 // pred_region
          _
        $region16: #{tpu_custom_call.1} parent=11 // pred_fallthru
          _
      $region12: #{tpu_custom_call.1} parent=5 // pred_fallthru
        _
      %p102 = scmp.lt.s32.totalorder %s11, 2
      // Predicated region
      $region17: #{tpu_custom_call.1} parent=5 // pred_check
        %p103 = pneg %p102
      $region18: #{tpu_custom_call.1} parent=5 // pred_check_branch
        %105 = sbr.rel (%p103) target = $region20
      $region19: #{tpu_custom_call.1} parent=5 // pred_region
        // Predicated region
        $region21: #{tpu_custom_call.1} parent=19 // pred_check
          %p106 = pneg %p31
        $region22: #{tpu_custom_call.1} parent=19 // pred_check_branch
          %108 = sbr.rel (%p106) target = $region24
        $region23: #{tpu_custom_call.1} parent=19 // pred_region
          %p109 = scmp.lt.s32.totalorder %s11, 1
          %s110 = scalar_select %p109, %s11, 1
          %s111 = smul.addr %s110, 8
          %s112 = scalar_lea.vmem %s0, %s111
        $region24: #{tpu_custom_call.1} parent=19 // pred_fallthru
          _
      $region20: #{tpu_custom_call.1} parent=5 // pred_fallthru
        _
      %p113 = scmp.le.s32.totalorder 1, %s11
      %p114 = scmp.lt.s32.totalorder %s11, 3
      %p115 = pnand %p113, %p114
      %p116 = pneg %p115
      // Predicated region
      $region25: #{tpu_custom_call.1} parent=5 // pred_check
        _
      $region26: #{tpu_custom_call.1} parent=5 // pred_check_branch
        %118 = sbr.rel (%p115) target = $region28
      $region27: #{tpu_custom_call.1} parent=5 // pred_region
        %s119 = ssub.s32 %s11, 1
        %p120 = scmp.lt.s32.totalorder %s16, 1
        %s121 = scalar_select %p120, %s16, 1
        %s122 = smul.addr %s121, 8
        %s123 = scalar_lea.vmem %s0, %s122
        %p124 = pneg %p37
        %p125 = pneg %p34
        %p126 = pneg %p58
        %p127 = pneg %p55
        %p128 = pneg %p84
        %p129 = pneg %p81
        %s130 = sand.u32 %s71, 1
        %s131 = scalar_lea.sflag [#allocation3], %s130
        %s132 = sand.u32 %s71, 1
        %s133 = smul.addr %s132, 8
        %s134 = scalar_lea.vmem [#allocation2], %s133
        %p135 = scmp.lt.s32.totalorder %s16, 1
        %s136 = scalar_select %p135, %s16, 1
        %s137 = smul.addr %s136, 8
        %s138 = scalar_lea.vmem %s0, %s137
        %v139 = vlaneseq
        %v140 = vand.u32 %v139, 127
        %v141 = vld [vmem:[%s138] sm:$0xff]
        %142 = vset.pattern.permute.xlu0 0
        %143 = vperm.xlu0 %142, %v141
        %v144 = vpop.permute.xlu0 %143
        %vm145 = vcmp.eq.s32.totalorder %v144, %v140
        %v146 = vsel %vm145, 1, 0
        %v147 = vcvt.s32.f32 %v146
        %v148 = vld [vmem:[%s1] sm:$0xff]
        %v149 = vld [vmem:[%s1 + $0x8] sm:$0xff]
        %vm150 = vcmask 130048
        %v152 = vsel %vm150, %v147, 0
        %154 = vmatpush.msra.mxu0 0.0
        %155 = vmatpush.msra.mxu0 0.0
        %156 = vmatpush.msra.mxu0 0.0
        %157 = vmatpush.msra.mxu0 0.0
        %158 = vmatpush.msra.mxu0 0.0
        %159 = vmatpush.msra.mxu0 0.0
        %160 = vmatpush.msra.mxu0 0.0
        %161 = vmatpush.msra.mxu0 0.0
        %162 = vmatpush.msra.mxu0 0.0
        %163 = vmatpush.msra.mxu0 0.0
        %164 = vmatpush.msra.mxu0 0.0
        %165 = vmatpush.msra.mxu0 0.0
        %166 = vmatpush.msra.mxu0 0.0
        %167 = vmatpush.msra.mxu0 0.0
        %168 = vmatpush.msra.mxu0 %v149
        %169 = vmatpush.msra.mxu0 %v148
        %170 = vmatmul.f32.gmra.mxu0 %v152
        %v171 = vpop.f32.mrf.mxu0
        %v172 = vadd.f32 0.0, %v171
        %173 = vdwg.mxu0
        %174 = vst [vmem:[%s134] sm:$0xff] %v172
        %s175 = sand.u32 %s71, 1
        %s176 = scalar_lea.sflag [#allocation3], %s175
        %s177 = sand.u32 %s71, 1
        %s178 = smul.addr %s177, 8
        %s179 = scalar_lea.vmem [#allocation2], %s178
        // Predicated region
        $region29: #{tpu_custom_call.1} parent=27 // pred_check
          %p180 = pneg %p81
        $region30: #{tpu_custom_call.1} parent=27 // pred_check_branch
          %182 = sbr.rel (%p180) target = $region32
        $region31: #{tpu_custom_call.1} parent=27 // pred_region
          %184 = vsyncadd %s176, 0
          %s185 = smul.addr %s16, 8
          %s186 = scalar_lea.hbm %s2, %s185
          %s188 = sshll.u32 %s179, 4
          %s189 = int_to_ptr.vmem [resolvable:$true] %s188
          %s190 = sshll.u32 %s186, 4
          %s191 = int_to_ptr.hbm [resolvable:$true] %s190
          %193 = dma.vmem_to_hbm [thread:$0]  %s189, 128, %s191, %s176
        $region32: #{tpu_custom_call.1} parent=27 // pred_fallthru
          _
      $region28: #{tpu_custom_call.1} parent=5 // pred_fallthru
        _
      %p194 = scmp.le.s32.totalorder 2, %s11
      // Predicated region
      $region33: #{tpu_custom_call.1} parent=5 // pred_check
        %p195 = pneg %p194
      $region34: #{tpu_custom_call.1} parent=5 // pred_check_branch
        %197 = sbr.rel (%p195) target = $region36
      $region35: #{tpu_custom_call.1} parent=5 // pred_region
        %s198 = ssub.s32 %s11, 2
        // Predicated region
        $region37: #{tpu_custom_call.1} parent=35 // pred_check
          %p199 = pneg %p87
        $region38: #{tpu_custom_call.1} parent=35 // pred_check_branch
          %201 = sbr.rel (%p199) target = $region40
        $region39: #{tpu_custom_call.1} parent=35 // pred_region
          %s202 = sand.u32 %s72, 1
          %s203 = scalar_lea.sflag [#allocation3], %s202
          %s204 = sand.u32 %s72, 1
          %s205 = smul.addr %s204, 8
          %s206 = scalar_lea.vmem [#allocation2], %s205
          %208 = dma.done %s203, 128
        $region40: #{tpu_custom_call.1} parent=35 // pred_fallthru
          _
      $region36: #{tpu_custom_call.1} parent=5 // pred_fallthru
        _
    $region6: #{tpu_custom_call.1} parent=1 // loop_footer
      %s15 = sadd.s32 1, %s11
    $region7: #{tpu_custom_call.1} parent=1 // loop_footer_branch
      %10 = sbr.rel target = $region3
    $region8: #{tpu_custom_call.1} parent=1 // loop_exit
      _
    %209 = vsyncpa [#allocation3], 1
    %s210 = scalar_lea.sflag [#allocation3], 1
    %211 = vsyncpa %s210, 1

// kernel: tpu_custom_call.1
$region0: #{tpu_custom_call.1}
  #allocation0 [shape = 'u32[]', space=smem, size = 0x4, offset = 0x4, fixed_abs, tag = 'smem constant byte address 0x4 - core index']
  #allocation1 [shape = 'u32[72,128]{1,0:T(1,128)}', space=vmem, size = 0x9000, scoped, tag = 'internal scratch']
  %s0 = inlined_call_operand.vmem [shape: s32[16,1], index: 0, kind: input, shape index: {}]
  %s1 = inlined_call_operand.vmem [shape: f32[16,128], index: 1, kind: input, shape index: {}]
  %s2 = inlined_call_operand.hbm [shape: f32[16,128], index: 2, kind: output, shape index: {}]
  %s3 = sld [smem:[#allocation0]]
  $region41: #{tpu_custom_call.1} parent=0
    _
  %s5 = ssub.s32 1, %s3
  %s6 = scalar_select 0, %s5, %s3
  $region1: #{tpu_custom_call.1} parent=0
    #allocation2 [shape = 'u8[8192]{0}', space=vmem, size = 0x2000, scoped, tag = 'output window, operand 0']
    #allocation3 [shape = 's32[2]{0}', space=sflag, size = 0x8, scoped, tag = 'scoped memory for tpu_custom_call.1']
    %7 = vsyncpa [#allocation3], 0
    %s8 = scalar_lea.sflag [#allocation3], 1
    %9 = vsyncpa %s8, 0
    loop: start=0, step=1, limit=4
    $region2: #{tpu_custom_call.1} parent=1 // loop_pre_header
      _
    $region3: #{tpu_custom_call.1} parent=1 // loop_header
      %s11 = sphi 0, %s15
      %p12 = scmp.ge.s32.totalorder %s11, 4
      %s21 = sphi 0, %s23
      %s24 = sphi 0, %s21
      %s25 = sphi 0, %s24
      %s41 = sphi 0, %s25
      %s45 = sphi 0, %s45
      %s47 = sphi 0, %s45
      %s48 = sphi 0, %s47
      %s62 = sphi 0, %s48
      %s68 = sphi 0, %s70
      %s71 = sphi 0, %s68
      %s72 = sphi 0, %s71
      %s88 = sphi 0, %s72
    $region4: #{tpu_custom_call.1} parent=1 // loop_header_branch
      %14 = sbr.rel (%p12) target = $region8
    $region5: #{tpu_custom_call.1} parent=1 // loop_body
      %s16 = ssub.s32 %s11, 1
      %s17 = ssub.s32 %s11, 2
      %s18 = sadd.s32 %s11, 1
      %s19 = ssub.s32 %s11, %s18
      %p20 = scmp.eq.s32.totalorder %s19, 0
      %s22 = sadd.s32 %s21, 1
      %s23 = scalar_select %p20, %s21, %s22
      %p26 = pneg %p20
      %p27 = scmp.eq.s32.totalorder %s11, 1
      %p28 = por %p26, %p27
      %p29 = scmp.ne.s32.totalorder %s21, %s24
      %p30 = scmp.eq.s32.totalorder %s11, 0
      %p31 = por %p29, %p30
      %p32 = scmp.ne.s32.totalorder %s21, %s24
      %p33 = scmp.eq.s32.totalorder %s16, 1
      %p34 = por %p32, %p33
      %p35 = scmp.ne.s32.totalorder %s24, %s25
      %p36 = scmp.eq.s32.totalorder %s16, 0
      %p37 = por %p35, %p36
      %p38 = scmp.ne.s32.totalorder %s24, %s25
      %p39 = scmp.eq.s32.totalorder %s17, 1
      %p40 = por %p38, %p39
      %p42 = scmp.ne.s32.totalorder %s25, %s41
      %p43 = scmp.eq.s32.totalorder %s17, 0
      %p44 = por %p42, %p43
      %s46 = sadd.s32 %s45, 1
      %p49 = scmp.eq.s32.totalorder %s11, 1
      %p50 = scmp.ne.s32.totalorder %s45, %s47
      %p51 = scmp.eq.s32.totalorder %s11, 0
      %p52 = por %p50, %p51
      %p53 = scmp.ne.s32.totalorder %s45, %s47
      %p54 = scmp.eq.s32.totalorder %s16, 1
      %p55 = por %p53, %p54
      %p56 = scmp.ne.s32.totalorder %s47, %s48
      %p57 = scmp.eq.s32.totalorder %s16, 0
      %p58 = por %p56, %p57
      %p59 = scmp.ne.s32.totalorder %s47, %s48
      %p60 = scmp.eq.s32.totalorder %s17, 1
      %p61 = por %p59, %p60
      %p63 = scmp.ne.s32.totalorder %s48, %s62
      %p64 = scmp.eq.s32.totalorder %s17, 0
      %p65 = por %p63, %p64
      %s66 = ssub.s32 %s11, %s18
      %p67 = scmp.eq.s32.totalorder %s66, 0
      %s69 = sadd.s32 %s68, 1
      %s70 = scalar_select %p67, %s68, %s69
      %p73 = pneg %p67
      %p74 = scmp.eq.s32.totalorder %s11, 1
      %p75 = por %p73, %p74
      %p76 = scmp.ne.s32.totalorder %s68, %s71
      %p77 = scmp.eq.s32.totalorder %s11, 0
      %p78 = por %p76, %p77
      %p79 = scmp.ne.s32.totalorder %s68, %s71
      %p80 = scmp.eq.s32.totalorder %s16, 1
      %p81 = por %p79, %p80
      %p82 = scmp.ne.s32.totalorder %s71, %s72
      %p83 = scmp.eq.s32.totalorder %s16, 0
      %p84 = por %p82, %p83
      %p85 = scmp.ne.s32.totalorder %s71, %s72
      %p86 = scmp.eq.s32.totalorder %s17, 1
      %p87 = por %p85, %p86
      %p89 = scmp.ne.s32.totalorder %s72, %s88
      %p90 = scmp.eq.s32.totalorder %s17, 0
      %p91 = por %p89, %p90
      %p92 = scmp.le.s32.totalorder 1, %s11
      %p93 = scmp.lt.s32.totalorder %s11, 3
      %p94 = pnand %p92, %p93
      %p95 = pneg %p94
      // Predicated region
      $region9: #{tpu_custom_call.1} parent=5 // pred_check
        _
      $region10: #{tpu_custom_call.1} parent=5 // pred_check_branch
        %97 = sbr.rel (%p94) target = $region12
      $region11: #{tpu_custom_call.1} parent=5 // pred_region
        %s98 = ssub.s32 %s11, 1
        // Predicated region
        $region13: #{tpu_custom_call.1} parent=11 // pred_check
          %p99 = pneg %p58
        $region14: #{tpu_custom_call.1} parent=11 // pred_check_branch
          %101 = sbr.rel (%p99) target = $region16
        $region15: #{tpu_custom_call.1} parent=11 // pred_region
          _
        $region16: #{tpu_custom_call.1} parent=11 // pred_fallthru
          _
      $region12: #{tpu_custom_call.1} parent=5 // pred_fallthru
        _
      %p102 = scmp.lt.s32.totalorder %s11, 2
      // Predicated region
      $region17: #{tpu_custom_call.1} parent=5 // pred_check
        %p103 = pneg %p102
      $region18: #{tpu_custom_call.1} parent=5 // pred_check_branch
        %105 = sbr.rel (%p103) target = $region20
      $region19: #{tpu_custom_call.1} parent=5 // pred_region
        // Predicated region
        $region21: #{tpu_custom_call.1} parent=19 // pred_check
          %p106 = pneg %p31
        $region22: #{tpu_custom_call.1} parent=19 // pred_check_branch
          %108 = sbr.rel (%p106) target = $region24
        $region23: #{tpu_custom_call.1} parent=19 // pred_region
          %p109 = scmp.lt.s32.totalorder %s11, 1
          %s110 = scalar_select %p109, %s11, 1
          %s111 = smul.addr %s110, 8
          %s112 = scalar_lea.vmem %s0, %s111
        $region24: #{tpu_custom_call.1} parent=19 // pred_fallthru
          _
      $region20: #{tpu_custom_call.1} parent=5 // pred_fallthru
        _
      %p113 = scmp.le.s32.totalorder 1, %s11
      %p114 = scmp.lt.s32.totalorder %s11, 3
      %p115 = pnand %p113, %p114
      %p116 = pneg %p115
      // Predicated region
      $region25: #{tpu_custom_call.1} parent=5 // pred_check
        _
      $region26: #{tpu_custom_call.1} parent=5 // pred_check_branch
        %118 = sbr.rel (%p115) target = $region28
      $region27: #{tpu_custom_call.1} parent=5 // pred_region
        %s119 = ssub.s32 %s11, 1
        %p120 = scmp.lt.s32.totalorder %s16, 1
        %s121 = scalar_select %p120, %s16, 1
        %s122 = smul.addr %s121, 8
        %s123 = scalar_lea.vmem %s0, %s122
        %p124 = pneg %p37
        %p125 = pneg %p34
        %p126 = pneg %p58
        %p127 = pneg %p55
        %p128 = pneg %p84
        %p129 = pneg %p81
        %s130 = sand.u32 %s71, 1
        %s131 = scalar_lea.sflag [#allocation3], %s130
        %s132 = sand.u32 %s71, 1
        %s133 = smul.addr %s132, 8
        %s134 = scalar_lea.vmem [#allocation2], %s133
        %p135 = scmp.lt.s32.totalorder %s16, 1
        %s136 = scalar_select %p135, %s16, 1
        %s137 = smul.addr %s136, 8
        %s138 = scalar_lea.vmem %s0, %s137
        %v139 = vlaneseq
        %v140 = vand.u32 %v139, 127
        %v141 = vld [vmem:[%s138] sm:$0xff]
        %142 = vset.pattern.permute.xlu0 0
        %143 = vperm.xlu0 %142, %v141
        %v144 = vpop.permute.xlu0 %143
        %vm145 = vcmp.eq.s32.totalorder %v144, %v140
        %v146 = vsel %vm145, 1, 0
        %v147 = vcvt.s32.f32 %v146
        %v148 = vld [vmem:[%s1] sm:$0xff]
        %v149 = vld [vmem:[%s1 + $0x8] sm:$0xff]
        %vm150 = vcmask 130048
        %v152 = vsel %vm150, %v147, 0
        %154 = vmatpush.msra.mxu0 0.0
        %155 = vmatpush.msra.mxu0 0.0
        %156 = vmatpush.msra.mxu0 0.0
        %157 = vmatpush.msra.mxu0 0.0
        %158 = vmatpush.msra.mxu0 0.0
        %159 = vmatpush.msra.mxu0 0.0
        %160 = vmatpush.msra.mxu0 0.0
        %161 = vmatpush.msra.mxu0 0.0
        %162 = vmatpush.msra.mxu0 0.0
        %163 = vmatpush.msra.mxu0 0.0
        %164 = vmatpush.msra.mxu0 0.0
        %165 = vmatpush.msra.mxu0 0.0
        %166 = vmatpush.msra.mxu0 0.0
        %167 = vmatpush.msra.mxu0 0.0
        %168 = vmatpush.msra.mxu0 %v149
        %169 = vmatpush.msra.mxu0 %v148
        %170 = vmatmul.f32.gmra.mxu0 %v152
        %v171 = vpop.f32.mrf.mxu0
        %v172 = vadd.f32 0.0, %v171
        %173 = vdwg.mxu0
        %174 = vst [vmem:[%s134] sm:$0xff] %v172
        %s175 = sand.u32 %s71, 1
        %s176 = scalar_lea.sflag [#allocation3], %s175
        %s177 = sand.u32 %s71, 1
        %s178 = smul.addr %s177, 8
        %s179 = scalar_lea.vmem [#allocation2], %s178
        // Predicated region
        $region29: #{tpu_custom_call.1} parent=27 // pred_check
          %p180 = pneg %p81
        $region30: #{tpu_custom_call.1} parent=27 // pred_check_branch
          %182 = sbr.rel (%p180) target = $region32
        $region31: #{tpu_custom_call.1} parent=27 // pred_region
          %184 = vsyncadd %s176, 0
          %s185 = smul.addr %s16, 8
          %s186 = scalar_lea.hbm %s2, %s185
          %s188 = sshll.u32 %s179, 4
          %s189 = int_to_ptr.vmem [resolvable:$true] %s188
          %s190 = sshll.u32 %s186, 4
          %s191 = int_to_ptr.hbm [resolvable:$true] %s190
          %193 = dma.vmem_to_hbm [thread:$0]  %s189, 128, %s191, %s176
        $region32: #{tpu_custom_call.1} parent=27 // pred_fallthru
          _
      $region28: #{tpu_custom_call.1} parent=5 // pred_fallthru
        _
      %p194 = scmp.le.s32.totalorder 2, %s11
      // Predicated region
      $region33: #{tpu_custom_call.1} parent=5 // pred_check
        %p195 = pneg %p194
      $region34: #{tpu_custom_call.1} parent=5 // pred_check_branch
        %197 = sbr.rel (%p195) target = $region36
      $region35: #{tpu_custom_call.1} parent=5 // pred_region
        %s198 = ssub.s32 %s11, 2
        // Predicated region
        $region37: #{tpu_custom_call.1} parent=35 // pred_check
          %p199 = pneg %p87
        $region38: #{tpu_custom_call.1} parent=35 // pred_check_branch
          %201 = sbr.rel (%p199) target = $region40
        $region39: #{tpu_custom_call.1} parent=35 // pred_region
          %s202 = sand.u32 %s72, 1
          %s203 = scalar_lea.sflag [#allocation3], %s202
          %s204 = sand.u32 %s72, 1
          %s205 = smul.addr %s204, 8
          %s206 = scalar_lea.vmem [#allocation2], %s205
          %208 = dma.done %s203, 128
        $region40: #{tpu_custom_call.1} parent=35 // pred_fallthru
          _
      $region36: #{tpu_custom_call.1} parent=5 // pred_fallthru
        _
    $region6: #{tpu_custom_call.1} parent=1 // loop_footer
      %s15 = sadd.s32 1, %s11
    $region7: #{tpu_custom_call.1} parent=1 // loop_footer_branch
      %10 = sbr.rel target = $region3
    $region8: #{tpu_custom_call.1} parent=1 // loop_exit
      _
    %209 = vsyncpa [#allocation3], 1
    %s210 = scalar_lea.sflag [#allocation3], 1
    %211 = vsyncpa %s210, 1

</llo_original>
